<compile_context>
chip_gen: v7x
topology: tpu7x:2x2x1
jax: 0.10.0
libtpu: 0.0.40
codegen_flags: <defaults>
</compile_context>

<pallas_src>
import math

import jax
import jax.numpy as jnp
from jax import lax
from jax.experimental import pallas as pl
from jax.experimental.pallas import tpu as pltpu


def _round_up(v, m):
    return (v + m - 1) // m * m


# ----------------------------- Pallas kernel ------------------------------ #
def sag_score_kernel(src_ref, dst_ref, xt_ref, xtile_ref, w_ref, b_ref,
                     score_ref, acc_ref, xwrel_ref):
    # src_ref   : (1, Et)  int32  edge sources of this edge tile (-1 padded)
    # dst_ref   : (Et, 1)  int32  edge destinations of this edge tile (-1 pad)
    # xt_ref    : (Fs, Np) f32    ALL node features, transposed (zero padded)
    # xtile_ref : (Fs, Nt) f32    node features of THIS node tile (transposed)
    # w_ref     : (Fs, 2)  f32    col 0 = lin_rel weight, col 1 = lin_root
    # b_ref     : (1, 1)   f32    lin_rel bias (SMEM scalar)
    # score_ref : (1, Nt)  f32    output: tanh(GraphConv(x)) for this tile
    # acc_ref   : (1, Nt)  f32    VMEM accumulator across edge tiles
    # xwrel_ref : (1, Np)  f32    VMEM per-node relational projection
    k = pl.program_id(1)
    n_k = pl.num_programs(1)
    et = src_ref.shape[1]
    nt = score_ref.shape[1]
    np_full = xt_ref.shape[1]
    base = pl.program_id(0) * nt          # first node id of this node tile

    @pl.when(k == 0)
    def _():
        acc_ref[...] = jnp.zeros_like(acc_ref)
        # Relational weight applied BEFORE gather/scatter (associativity), and
        # only once per node tile: a single scalar per node flows through the
        # one-hot matmuls.  VPU multiply + sublane reduce (tiny K = Fs).
        xwrel_ref[...] = jnp.sum(xt_ref[...] * w_ref[:, 0:1],
                                 axis=0, keepdims=True)              # (1, Np)

    # one-hot gather: gathered[0, e] = xw_rel[src[e]]   (padded edges -> 0)
    # TODO(synk): O(E*N) one-hot work; fine at module scale (N=100, E=200) but
    #             a source-node-tiled variant would be needed for huge graphs.
    node_iota = lax.broadcasted_iota(jnp.int32, (np_full, et), 0)
    src_oh = (src_ref[...] == node_iota).astype(jnp.float32)         # (Np, Et)
    gathered = jnp.dot(xwrel_ref[...], src_oh,
                       preferred_element_type=jnp.float32)           # (1, Et)

    # one-hot scatter-add into THIS node tile:
    #   acc[0, i] += sum_{e: dst[e] == base + i} gathered[e]
    tile_iota = lax.broadcasted_iota(jnp.int32, (et, nt), 1) + base
    dst_oh = (dst_ref[...] == tile_iota).astype(jnp.float32)         # (Et, Nt)
    acc_ref[...] += jnp.dot(gathered, dst_oh,
                            preferred_element_type=jnp.float32)      # (1, Nt)

    @pl.when(k == n_k - 1)
    def _():
        xw_root = jnp.sum(xtile_ref[...] * w_ref[:, 1:2],
                          axis=0, keepdims=True)                     # (1, Nt)
        score_ref[...] = jnp.tanh(acc_ref[...] + xw_root + b_ref[0, 0])


def sag_scores(x, src, dst, params, *, node_tile=128, edge_tile=256):
    """tanh(GraphConv(x, edge_index)) per node, via the Pallas kernel."""
    N, F = x.shape
    E = int(src.shape[0])

    Fs = _round_up(max(F, 1), 8)               # features padded to sublane mult
    Np = _round_up(max(N, 1), node_tile)
    Ep = _round_up(max(E, 1), edge_tile)
    n_i = Np // node_tile                      # node tiles  (parallel)
    n_k = Ep // edge_tile                      # edge tiles  (reduction)

    # Nodes on the lane axis (lane-dense scores), features on sublanes.
    xT = jnp.zeros((Fs, Np), jnp.float32).at[:F, :N].set(
        x.astype(jnp.float32).T)
    src_row = jnp.full((1, Ep), -1, jnp.int32).at[0, :E].set(
        src.astype(jnp.int32))
    dst_col = jnp.full((Ep, 1), -1, jnp.int32).at[:E, 0].set(
        dst.astype(jnp.int32))
    w = jnp.zeros((Fs, 2), jnp.float32)
    w = w.at[:F, 0:1].set(params["w_rel"].astype(jnp.float32))
    w = w.at[:F, 1:2].set(params["w_root"].astype(jnp.float32))
    bias = params["b_rel"].reshape(1, 1).astype(jnp.float32)

    score_row = pl.pallas_call(
        sag_score_kernel,
        out_shape=jax.ShapeDtypeStruct((1, Np), jnp.float32),
        grid=(n_i, n_k),
        in_specs=[
            pl.BlockSpec((1, edge_tile), lambda i, k: (0, k)),     # src tile
            pl.BlockSpec((edge_tile, 1), lambda i, k: (k, 0)),     # dst tile
            pl.BlockSpec((Fs, Np), lambda i, k: (0, 0)),           # x^T (all)
            pl.BlockSpec((Fs, node_tile), lambda i, k: (0, i)),    # x^T (tile)
            pl.BlockSpec((Fs, 2), lambda i, k: (0, 0)),            # [w_rel|w_root]
            pl.BlockSpec(memory_space=pltpu.MemorySpace.SMEM),     # bias scalar
        ],
        out_specs=pl.BlockSpec((1, node_tile), lambda i, k: (0, i)),
        scratch_shapes=[pltpu.VMEM((1, node_tile), jnp.float32),   # acc
                        pltpu.VMEM((1, Np), jnp.float32)],         # xw_rel
        compiler_params=pltpu.CompilerParams(
            dimension_semantics=("parallel", "arbitrary"),
            vmem_limit_bytes=32 * 1024 * 1024),
    )(src_row, dst_col, xT, xT, w, bias)

    return score_row[0, :N]


# --------------------------- pure-JAX reference ---------------------------- #
def graphconv_tanh_score_ref(x, src, dst, params):
    N = x.shape[0]
    agg = jax.ops.segment_sum(x[src], dst, num_segments=N)          # (N, F)
    s = agg @ params["w_rel"] + x @ params["w_root"] + params["b_rel"]
    return jnp.tanh(s[:, 0])


# ------------------------------ JAX wrapper -------------------------------- #
def init_pool_graph_params(num_node_features, key):
    k1, k2, k3 = jax.random.split(key, 3)
    # GraphConv(num_node_features, 1): lin_rel (with bias) + lin_root (no bias)
    w_rel = jax.random.normal(k1, (num_node_features, 1), jnp.float32) * 0.5
    w_root = jax.random.normal(k2, (num_node_features, 1), jnp.float32) * 0.5
    b_rel = jax.random.normal(k3, (1,), jnp.float32) * 0.1
    return {"w_rel": w_rel, "w_root": w_root, "b_rel": b_rel}


def pool_unpool_graph_forward(x, edge_index, batch, params, ratio=0.5):
    """Eager forward. x:(N,F) f32, edge_index:(2,E) int32, batch:(N,) int32.

    Returns (x_unpooled, x_cg, edge_index_unpooled, new_batch), matching
    PoolUnpoolGraph.forward.
    """
    N, F = x.shape
    src = edge_index[0].astype(jnp.int32)
    dst = edge_index[1].astype(jnp.int32)

    score = sag_scores(x, src, dst, params)                         # (N,)

    # --- per-graph top-k (PyG `topk`): dynamic output size, eager JAX glue ---
    # TODO(synk): dynamic-shape top-k / edge compaction have no clean
    #             fixed-shape Pallas equivalent; done eagerly in JAX here.
    num_graphs = int(jax.device_get(jnp.max(batch))) + 1
    perms = []
    for g in range(num_graphs):
        idx = jnp.where(batch == g)[0]
        n_g = int(idx.shape[0])
        k = int(math.ceil(ratio * n_g))
        order = jnp.argsort(-score[idx])[:k]
        perms.append(idx[order])
    perm = jnp.concatenate(perms).astype(jnp.int32)

    # SAGPooling outputs (multiplier == 1)
    x_cg = x[perm] * score[perm][:, None]
    new_batch = batch[perm]

    # filter_adj: keep edges whose endpoints both survive, remap to new ids
    node_new = jnp.full((N,), -1, jnp.int32).at[perm].set(
        jnp.arange(perm.shape[0], dtype=jnp.int32))
    keep = (node_new[src] >= 0) & (node_new[dst] >= 0)
    kept_e = jnp.where(keep)[0]
    edge_index_cg = jnp.stack(
        [node_new[src[kept_e]], node_new[dst[kept_e]]], axis=0)

    # PoolUnpoolGraph-specific part
    x_unpooled = x[perm]
    rev_perm = jnp.argsort(perm).astype(jnp.int32)                  # unpool()
    edge_index_unpooled = jnp.stack(
        [rev_perm[edge_index_cg[0]], rev_perm[edge_index_cg[1]]], axis=0)

    return x_unpooled, x_cg, edge_index_unpooled, new_batch


if __name__ == "__main__":
    # Shapes implied by the module: x (100, 1), edge_index (2, 200), 1 graph.
    N, F, E = 100, 1, 200
    key = jax.random.PRNGKey(0)
    kx, ke, kp = jax.random.split(key, 3)

    x = jax.random.normal(kx, (N, F), jnp.float32)
    edge_index = jax.random.randint(ke, (2, E), 0, N, dtype=jnp.int32)
    batch = jnp.zeros((N,), jnp.int32)

    params = init_pool_graph_params(num_node_features=F, key=kp)

    # --- kernel sanity check against a pure-JAX GraphConv reference ---------
    score_k = sag_scores(x, edge_index[0], edge_index[1], params)
    score_r = graphconv_tanh_score_ref(x, edge_index[0], edge_index[1], params)
    jax.block_until_ready(score_k)
    max_err = float(jnp.max(jnp.abs(score_k - score_r)))
    assert max_err < 5e-3, f"score mismatch vs reference: {max_err}"

    # --- full PoolUnpoolGraph forward ---------------------------------------
    x_unpooled, x_cg, edge_index_unpooled, new_batch = pool_unpool_graph_forward(
        x, edge_index, batch, params)
    jax.block_until_ready((x_unpooled, x_cg, edge_index_unpooled, new_batch))

    assert x_unpooled.shape == (50, 1)          # ceil(0.5 * 100) nodes kept
    assert x_cg.shape == (50, 1)
    assert new_batch.shape == (50,)
    assert edge_index_unpooled.shape[0] == 2
    print("KERNEL_OK")
</pallas_src>

<mosaic_0001>
module attributes {stable_mosaic.version = 11 : i64} {
  func.func @sag_score_kernel(%arg0: i32, %arg1: i32, %arg2: memref<1x256xi32, #tpu.memory_space<vmem>>, %arg3: memref<256x1xi32, #tpu.memory_space<vmem>>, %arg4: memref<8x128xf32, #tpu.memory_space<vmem>>, %arg5: memref<8x128xf32, #tpu.memory_space<vmem>>, %arg6: memref<8x2xf32, #tpu.memory_space<vmem>>, %arg7: memref<1x1xf32, #tpu.memory_space<smem>>, %arg8: memref<1x128xf32, #tpu.memory_space<vmem>>, %arg9: memref<1x128xf32, #tpu.memory_space<vmem>>, %arg10: memref<1x128xf32, #tpu.memory_space<vmem>>) attributes {dimension_semantics = [#tpu.dimension_semantics<parallel>, #tpu.dimension_semantics<arbitrary>], iteration_bounds = array<i64: 1, 1>, scalar_prefetch = 0 : i64, scratch_operands = 2 : i64, tpu.core_type = #tpu.core_type<tc>, window_params = [{transform_indices = @transform_0, window_bounds = array<i64: 1, 256>}, {transform_indices = @transform_1, window_bounds = array<i64: 256, 1>}, {pipeline_mode = #tpu.pipeline_mode<synchronous>, transform_indices = @transform_2, window_bounds = array<i64: 8, 128>}, {transform_indices = @transform_3, window_bounds = array<i64: 8, 128>}, {pipeline_mode = #tpu.pipeline_mode<synchronous>, transform_indices = @transform_4, window_bounds = array<i64: 8, 2>}, {transform_indices = @transform_5, window_bounds = array<i64: 1, 1>}, {transform_indices = @transform_6, window_bounds = array<i64: 1, 128>}]} {
    %c128_i32 = arith.constant 128 : i32
    %0 = arith.muli %arg0, %c128_i32 : i32
    %c0_i32 = arith.constant 0 : i32
    %1 = arith.cmpi eq, %arg1, %c0_i32 : i32
    %2 = arith.extui %1 : i1 to i32
    %c0_i32_0 = arith.constant 0 : i32
    %3 = arith.cmpi ne, %2, %c0_i32_0 : i32
    scf.if %3 {
      %cst_13 = arith.constant 0.000000e+00 : f32
      %27 = vector.broadcast %cst_13 : f32 to vector<1x128xf32>
      %c0_14 = arith.constant 0 : index
      %c0_15 = arith.constant 0 : index
      %28 = vector.load %arg9[%c0_14, %c0_15] : memref<1x128xf32, #tpu.memory_space<vmem>>, vector<1x128xf32>
      tpu.vector_store %arg9[%c0_14, %c0_15], %27 {strides = array<i32>} : memref<1x128xf32, #tpu.memory_space<vmem>>, vector<1x128xf32>,
      %c0_16 = arith.constant 0 : index
      %c0_17 = arith.constant 0 : index
      %29 = vector.load %arg4[%c0_16, %c0_17] : memref<8x128xf32, #tpu.memory_space<vmem>>, vector<8x128xf32>
      %c0_18 = arith.constant 0 : index
      %c0_19 = arith.constant 0 : index
      %30 = vector.load %arg6[%c0_18, %c0_19] : memref<8x2xf32, #tpu.memory_space<vmem>>, vector<8x1xf32>
      %31 = vector.broadcast %30 : vector<8x1xf32> to vector<8x128xf32>
      %32 = arith.mulf %29, %31 : vector<8x128xf32>
      %cst_20 = arith.constant dense<0.000000e+00> : vector<128xf32>
      %33 = vector.multi_reduction <add>, %32, %cst_20 [0] : vector<8x128xf32> to vector<128xf32>
      %34 = vector.shape_cast %33 : vector<128xf32> to vector<1x128xf32>
      %c0_21 = arith.constant 0 : index
      %c0_22 = arith.constant 0 : index
      %35 = vector.load %arg10[%c0_21, %c0_22] : memref<1x128xf32, #tpu.memory_space<vmem>>, vector<1x128xf32>
      tpu.vector_store %arg10[%c0_21, %c0_22], %34 {strides = array<i32>} : memref<1x128xf32, #tpu.memory_space<vmem>>, vector<1x128xf32>,
    } else {
    }
    %4 = tpu.iota {dimensions = array<i32: 0>} : vector<128x256xi32>
    %c0 = arith.constant 0 : index
    %c0_1 = arith.constant 0 : index
    %5 = vector.load %arg2[%c0, %c0_1] : memref<1x256xi32, #tpu.memory_space<vmem>>, vector<1x256xi32>
    %6 = vector.broadcast %5 : vector<1x256xi32> to vector<128x256xi32>
    %7 = arith.cmpi eq, %6, %4 : vector<128x256xi32>
    %8 = arith.extui %7 : vector<128x256xi1> to vector<128x256xi32>
    %9 = arith.sitofp %8 : vector<128x256xi32> to vector<128x256xf32>
    %c0_2 = arith.constant 0 : index
    %c0_3 = arith.constant 0 : index
    %10 = vector.load %arg10[%c0_2, %c0_3] : memref<1x128xf32, #tpu.memory_space<vmem>>, vector<1x128xf32>
    %cst = arith.constant dense<0.000000e+00> : vector<1x256xf32>
    %11 = tpu.matmul %10, %9, %cst {dimension_numbers = #tpu.dot_dimension_numbers<[1], [0], [0], [1], [0, 0, 1, 1], [], []>} : vector<1x128xf32>, vector<128x256xf32>, vector<1x256xf32> -> vector<1x256xf32>
    %12 = tpu.iota {dimensions = array<i32: 1>} : vector<256x128xi32>
    %13 = vector.broadcast %0 : i32 to vector<256x128xi32>
    %14 = arith.addi %12, %13 : vector<256x128xi32>
    %c0_4 = arith.constant 0 : index
    %c0_5 = arith.constant 0 : index
    %15 = vector.load %arg3[%c0_4, %c0_5] : memref<256x1xi32, #tpu.memory_space<vmem>>, vector<256x1xi32>
    %16 = vector.broadcast %15 : vector<256x1xi32> to vector<256x128xi32>
    %17 = arith.cmpi eq, %16, %14 : vector<256x128xi32>
    %18 = arith.extui %17 : vector<256x128xi1> to vector<256x128xi32>
    %19 = arith.sitofp %18 : vector<256x128xi32> to vector<256x128xf32>
    %c0_6 = arith.constant 0 : index
    %c0_7 = arith.constant 0 : index
    %20 = vector.load %arg9[%c0_6, %c0_7] : memref<1x128xf32, #tpu.memory_space<vmem>>, vector<1x128xf32>
    %cst_8 = arith.constant dense<0.000000e+00> : vector<1x128xf32>
    %21 = tpu.matmul %11, %19, %cst_8 {dimension_numbers = #tpu.dot_dimension_numbers<[1], [0], [0], [1], [0, 0, 1, 1], [], []>} : vector<1x256xf32>, vector<256x128xf32>, vector<1x128xf32> -> vector<1x128xf32>
    %22 = arith.addf %20, %21 : vector<1x128xf32>
    %c0_9 = arith.constant 0 : index
    %c0_10 = arith.constant 0 : index
    %23 = vector.load %arg9[%c0_9, %c0_10] : memref<1x128xf32, #tpu.memory_space<vmem>>, vector<1x128xf32>
    tpu.vector_store %arg9[%c0_9, %c0_10], %22 {strides = array<i32>} : memref<1x128xf32, #tpu.memory_space<vmem>>, vector<1x128xf32>,
    %c0_i32_11 = arith.constant 0 : i32
    %24 = arith.cmpi eq, %arg1, %c0_i32_11 : i32
    %25 = arith.extui %24 : i1 to i32
    %c0_i32_12 = arith.constant 0 : i32
    %26 = arith.cmpi ne, %25, %c0_i32_12 : i32
    scf.if %26 {
      %c0_13 = arith.constant 0 : index
      %c0_14 = arith.constant 0 : index
      %27 = vector.load %arg5[%c0_13, %c0_14] : memref<8x128xf32, #tpu.memory_space<vmem>>, vector<8x128xf32>
      %c0_15 = arith.constant 0 : index
      %c1 = arith.constant 1 : index
      %28 = vector.load %arg6[%c0_15, %c1] : memref<8x2xf32, #tpu.memory_space<vmem>>, vector<8x1xf32>
      %29 = vector.broadcast %28 : vector<8x1xf32> to vector<8x128xf32>
      %30 = arith.mulf %27, %29 : vector<8x128xf32>
      %cst_16 = arith.constant dense<0.000000e+00> : vector<128xf32>
      %31 = vector.multi_reduction <add>, %30, %cst_16 [0] : vector<8x128xf32> to vector<128xf32>
      %32 = vector.shape_cast %31 : vector<128xf32> to vector<1x128xf32>
      %c0_17 = arith.constant 0 : index
      %c0_18 = arith.constant 0 : index
      %33 = vector.load %arg9[%c0_17, %c0_18] : memref<1x128xf32, #tpu.memory_space<vmem>>, vector<1x128xf32>
      %34 = arith.addf %33, %32 : vector<1x128xf32>
      %c0_19 = arith.constant 0 : index
      %c0_20 = arith.constant 0 : index
      %35 = memref.load %arg7[%c0_19, %c0_20] : memref<1x1xf32, #tpu.memory_space<smem>>
      %36 = vector.broadcast %35 : f32 to vector<1x128xf32>
      %37 = arith.addf %34, %36 : vector<1x128xf32>
      %38 = math.tanh %37 : vector<1x128xf32>
      %c0_21 = arith.constant 0 : index
      %c0_22 = arith.constant 0 : index
      %39 = vector.load %arg8[%c0_21, %c0_22] : memref<1x128xf32, #tpu.memory_space<vmem>>, vector<1x128xf32>
      tpu.vector_store %arg8[%c0_21, %c0_22], %38 {strides = array<i32>} : memref<1x128xf32, #tpu.memory_space<vmem>>, vector<1x128xf32>,
    } else {
    }
    return
  }
  func.func @transform_0(%arg0: i32, %arg1: i32) -> (i32, i32) {
    %c0_i32 = arith.constant 0 : i32
    %c0_i32_0 = arith.constant 0 : i32
    return %c0_i32, %arg1 : i32, i32
  }
  func.func @transform_1(%arg0: i32, %arg1: i32) -> (i32, i32) {
    %c0_i32 = arith.constant 0 : i32
    %c0_i32_0 = arith.constant 0 : i32
    return %arg1, %c0_i32 : i32, i32
  }
  func.func @transform_2(%arg0: i32, %arg1: i32) -> (i32, i32) {
    %c0_i32 = arith.constant 0 : i32
    %c0_i32_0 = arith.constant 0 : i32
    %c0_i32_1 = arith.constant 0 : i32
    return %c0_i32, %c0_i32_0 : i32, i32
  }
  func.func @transform_3(%arg0: i32, %arg1: i32) -> (i32, i32) {
    %c0_i32 = arith.constant 0 : i32
    %c0_i32_0 = arith.constant 0 : i32
    return %c0_i32, %arg0 : i32, i32
  }
  func.func @transform_4(%arg0: i32, %arg1: i32) -> (i32, i32) {
    %c0_i32 = arith.constant 0 : i32
    %c0_i32_0 = arith.constant 0 : i32
    %c0_i32_1 = arith.constant 0 : i32
    return %c0_i32, %c0_i32_0 : i32, i32
  }
  func.func @transform_5(%arg0: i32, %arg1: i32) -> (i32, i32) {
    %c0_i32 = arith.constant 0 : i32
    %c0_i32_0 = arith.constant 0 : i32
    %c0_i32_1 = arith.constant 0 : i32
    return %c0_i32, %c0_i32_0 : i32, i32
  }
  func.func @transform_6(%arg0: i32, %arg1: i32) -> (i32, i32) {
    %c0_i32 = arith.constant 0 : i32
    %c0_i32_0 = arith.constant 0 : i32
    return %c0_i32, %arg0 : i32, i32
  }
}

</mosaic_0001>

<llo_original>
// kernel: tpu_custom_call.1
$region0: #{tpu_custom_call.1}
  #allocation0 [shape = 'u32[]', space=smem, size = 0x4, offset = 0x4, fixed_abs, tag = 'smem constant byte address 0x4 - core index']
  #allocation1 [shape = 'u32[144,128]{1,0:T(1,128)}', space=vmem, size = 0x12000, scoped, tag = 'internal scratch']
  #allocation2 [shape = 'f32[1,128]{1,0:T(1,128)}', space=vmem, size = 0x200, scoped, tag = 'scratch operand']
  #allocation3 [shape = 'f32[1,128]{1,0:T(1,128)}', space=vmem, size = 0x200, scoped, tag = 'scratch operand']
  #allocation4 [shape = 'f32[1,1]{1,0:T(1,128)S(6)}', space=smem, size = 0x200, scoped, tag = 'scoped memory for tpu_custom_call.1']
  %s0 = inlined_call_operand.vmem [shape: s32[1,256], index: 0, kind: input, shape index: {}]
  %s1 = inlined_call_operand.vmem [shape: s32[256,1], index: 1, kind: input, shape index: {}]
  %s2 = inlined_call_operand.vmem [shape: f32[8,128], index: 2, kind: input, shape index: {}]
  %s3 = inlined_call_operand.vmem [shape: f32[8,128], index: 3, kind: input, shape index: {}]
  %s4 = inlined_call_operand.vmem [shape: f32[8,2], index: 4, kind: input, shape index: {}]
  %s5 = inlined_call_operand.<no memory space> [shape: f32[1,1], index: 5, kind: input, shape index: {}]
  %s6 = inlined_call_operand.hbm [shape: f32[1,128], index: 6, kind: output, shape index: {}]
  %s7 = sld [smem:[#allocation0]]
  $region42: #{tpu_custom_call.1} parent=0
    _
  %s9 = ssub.s32 1, %s7
  %s10 = scalar_select 0, %s9, %s7
  %11 = sst [smem:[#allocation4]] %s5
  $region1: #{tpu_custom_call.1} parent=0
    #allocation5 [shape = 'u8[512]{0}', space=vmem, size = 0x400, scoped, tag = 'output window, operand 0, single buffered']
    #allocation6 [shape = 's32[1]{0}', space=sflag, size = 0x4, scoped, tag = 'scoped memory for tpu_custom_call.1']
    %12 = vsyncpa [#allocation6], 0
    // Predicated region
    $region2: #{tpu_custom_call.1} parent=1 // pred_check
      _
    $region3: #{tpu_custom_call.1} parent=1 // pred_check_branch
      %14 = sbr.rel (0) target = $region5
    $region4: #{tpu_custom_call.1} parent=1 // pred_region
      _
    $region5: #{tpu_custom_call.1} parent=1 // pred_fallthru
      _
    // Predicated region
    $region6: #{tpu_custom_call.1} parent=1 // pred_check
      _
    $region7: #{tpu_custom_call.1} parent=1 // pred_check_branch
      %16 = sbr.rel (0) target = $region9
    $region8: #{tpu_custom_call.1} parent=1 // pred_region
      _
    $region9: #{tpu_custom_call.1} parent=1 // pred_fallthru
      _
    // Predicated region
    $region10: #{tpu_custom_call.1} parent=1 // pred_check
      _
    $region11: #{tpu_custom_call.1} parent=1 // pred_check_branch
      %18 = sbr.rel (0) target = $region13
    $region12: #{tpu_custom_call.1} parent=1 // pred_region
      _
    $region13: #{tpu_custom_call.1} parent=1 // pred_fallthru
      _
    // Predicated region
    $region14: #{tpu_custom_call.1} parent=1 // pred_check
      _
    $region15: #{tpu_custom_call.1} parent=1 // pred_check_branch
      %20 = sbr.rel (0) target = $region17
    $region16: #{tpu_custom_call.1} parent=1 // pred_region
      _
    $region17: #{tpu_custom_call.1} parent=1 // pred_fallthru
      _
    // Predicated region
    $region18: #{tpu_custom_call.1} parent=1 // pred_check
      _
    $region19: #{tpu_custom_call.1} parent=1 // pred_check_branch
      %22 = sbr.rel (0) target = $region21
    $region20: #{tpu_custom_call.1} parent=1 // pred_region
      _
    $region21: #{tpu_custom_call.1} parent=1 // pred_fallthru
      _
    // Predicated region
    $region22: #{tpu_custom_call.1} parent=1 // pred_check
      _
    $region23: #{tpu_custom_call.1} parent=1 // pred_check_branch
      %24 = sbr.rel (0) target = $region25
    $region24: #{tpu_custom_call.1} parent=1 // pred_region
      _
    $region25: #{tpu_custom_call.1} parent=1 // pred_fallthru
      _
    %s25 = smul.u32 0, 128
    %p26 = scmp.eq.s32.totalorder 0, 0
    // Predicated region
    $region26: #{tpu_custom_call.1} parent=1 // pred_check
      %p27 = pneg %p26
    $region27: #{tpu_custom_call.1} parent=1 // pred_check_branch
      %29 = sbr.rel (%p27) target = $region29
    $region28: #{tpu_custom_call.1} parent=1 // pred_region
      %30 = vst [vmem:[#allocation2] sm:$0x1] 0.0
      %v31 = vld [vmem:[%s2] sm:$0xff]
      %v32 = vld [vmem:[%s4] sm:$0xff]
      %34 = vset.pattern.permute.xlu0 0
      %35 = vperm.xlu0 %34, %v32
      %v36 = vpop.permute.xlu0 %35
      %v38 = vmul.f32 %v31, %v36
      %v39 = vrot.slane %v38, 4
      %v40 = vadd.f32 %v38, %v39
      %v41 = vrot.slane %v40, 2
      %v42 = vadd.f32 %v40, %v41
      %v43 = vrot.slane %v42, 1
      %v44 = vadd.f32 %v42, %v43
      %45 = vst [vmem:[#allocation3] sm:$0x1] %v44
    $region29: #{tpu_custom_call.1} parent=1 // pred_fallthru
      _
    %v46 = vlaneseq
    %v47 = vshrl.u32 %v46, 7
    %v48 = vadd.s32 %v47, 8
    %v49 = vadd.s32 %v47, 16
    %v50 = vadd.s32 %v47, 24
    %v51 = vadd.s32 %v47, 32
    %v52 = vadd.s32 %v47, 40
    %v53 = vadd.s32 %v47, 48
    %v54 = vadd.s32 %v47, 56
    %v55 = vadd.s32 %v47, 64
    %v56 = vadd.s32 %v47, 72
    %v57 = vadd.s32 %v47, 80
    %v58 = vadd.s32 %v47, 88
    %v59 = vadd.s32 %v47, 96
    %v60 = vadd.s32 %v47, 104
    %v61 = vadd.s32 %v47, 112
    %v62 = vadd.s32 %v47, 120
    %v63 = vld [vmem:[%s0] sm:$0x3]
    %v64 = vlaneseq
    %v65 = vshrl.u32 %v64, 7
    %v66 = vsub.s32 0, %v65
    %v67 = vrot.slane %v63, %v66
    %v68 = vlaneseq
    %v69 = vshrl.u32 %v68, 7
    %v70 = vsub.s32 1, %v69
    %v71 = vrot.slane %v63, %v70
    %vm72 = vcmp.eq.s32.totalorder %v67, %v47
    %vm73 = vcmp.eq.s32.totalorder %v71, %v47
    %vm74 = vcmp.eq.s32.totalorder %v67, %v48
    %vm75 = vcmp.eq.s32.totalorder %v71, %v48
    %vm76 = vcmp.eq.s32.totalorder %v67, %v49
    %vm77 = vcmp.eq.s32.totalorder %v71, %v49
    %vm78 = vcmp.eq.s32.totalorder %v67, %v50
    %vm79 = vcmp.eq.s32.totalorder %v71, %v50
    %vm80 = vcmp.eq.s32.totalorder %v67, %v51
    %vm81 = vcmp.eq.s32.totalorder %v71, %v51
    %vm82 = vcmp.eq.s32.totalorder %v67, %v52
    %vm83 = vcmp.eq.s32.totalorder %v71, %v52
    %vm84 = vcmp.eq.s32.totalorder %v67, %v53
    %vm85 = vcmp.eq.s32.totalorder %v71, %v53
    %vm86 = vcmp.eq.s32.totalorder %v67, %v54
    %vm87 = vcmp.eq.s32.totalorder %v71, %v54
    %vm88 = vcmp.eq.s32.totalorder %v67, %v55
    %vm89 = vcmp.eq.s32.totalorder %v71, %v55
    %vm90 = vcmp.eq.s32.totalorder %v67, %v56
    %vm91 = vcmp.eq.s32.totalorder %v71, %v56
    %vm92 = vcmp.eq.s32.totalorder %v67, %v57
    %vm93 = vcmp.eq.s32.totalorder %v71, %v57
    %vm94 = vcmp.eq.s32.totalorder %v67, %v58
    %vm95 = vcmp.eq.s32.totalorder %v71, %v58
    %vm96 = vcmp.eq.s32.totalorder %v67, %v59
    %vm97 = vcmp.eq.s32.totalorder %v71, %v59
    %vm98 = vcmp.eq.s32.totalorder %v67, %v60
    %vm99 = vcmp.eq.s32.totalorder %v71, %v60
    %vm100 = vcmp.eq.s32.totalorder %v67, %v61
    %vm101 = vcmp.eq.s32.totalorder %v71, %v61
    %vm102 = vcmp.eq.s32.totalorder %v67, %v62
    %vm103 = vcmp.eq.s32.totalorder %v71, %v62
    %v104 = vsel %vm72, 1, 0
    %v105 = vsel %vm73, 1, 0
    %v106 = vsel %vm74, 1, 0
    %v107 = vsel %vm75, 1, 0
    %v108 = vsel %vm76, 1, 0
    %v109 = vsel %vm77, 1, 0
    %v110 = vsel %vm78, 1, 0
    %v111 = vsel %vm79, 1, 0
    %v112 = vsel %vm80, 1, 0
    %v113 = vsel %vm81, 1, 0
    %v114 = vsel %vm82, 1, 0
    %v115 = vsel %vm83, 1, 0
    %v116 = vsel %vm84, 1, 0
    %v117 = vsel %vm85, 1, 0
    %v118 = vsel %vm86, 1, 0
    %v119 = vsel %vm87, 1, 0
    %v120 = vsel %vm88, 1, 0
    %v121 = vsel %vm89, 1, 0
    %v122 = vsel %vm90, 1, 0
    %v123 = vsel %vm91, 1, 0
    %v124 = vsel %vm92, 1, 0
    %v125 = vsel %vm93, 1, 0
    %v126 = vsel %vm94, 1, 0
    %v127 = vsel %vm95, 1, 0
    %v128 = vsel %vm96, 1, 0
    %v129 = vsel %vm97, 1, 0
    %v130 = vsel %vm98, 1, 0
    %v131 = vsel %vm99, 1, 0
    %v132 = vsel %vm100, 1, 0
    %v133 = vsel %vm101, 1, 0
    %v134 = vsel %vm102, 1, 0
    %v135 = vsel %vm103, 1, 0
    %v136 = vcvt.s32.f32 %v104
    %v137 = vcvt.s32.f32 %v105
    %v138 = vcvt.s32.f32 %v106
    %v139 = vcvt.s32.f32 %v107
    %v140 = vcvt.s32.f32 %v108
    %v141 = vcvt.s32.f32 %v109
    %v142 = vcvt.s32.f32 %v110
    %v143 = vcvt.s32.f32 %v111
    %v144 = vcvt.s32.f32 %v112
    %v145 = vcvt.s32.f32 %v113
    %v146 = vcvt.s32.f32 %v114
    %v147 = vcvt.s32.f32 %v115
    %v148 = vcvt.s32.f32 %v116
    %v149 = vcvt.s32.f32 %v117
    %v150 = vcvt.s32.f32 %v118
    %v151 = vcvt.s32.f32 %v119
    %v152 = vcvt.s32.f32 %v120
    %v153 = vcvt.s32.f32 %v121
    %v154 = vcvt.s32.f32 %v122
    %v155 = vcvt.s32.f32 %v123
    %v156 = vcvt.s32.f32 %v124
    %v157 = vcvt.s32.f32 %v125
    %v158 = vcvt.s32.f32 %v126
    %v159 = vcvt.s32.f32 %v127
    %v160 = vcvt.s32.f32 %v128
    %v161 = vcvt.s32.f32 %v129
    %v162 = vcvt.s32.f32 %v130
    %v163 = vcvt.s32.f32 %v131
    %v164 = vcvt.s32.f32 %v132
    %v165 = vcvt.s32.f32 %v133
    %v166 = vcvt.s32.f32 %v134
    %v167 = vcvt.s32.f32 %v135
    %v168 = vld [vmem:[#allocation3] sm:$0x1]
    %169 = vmatprep.subr.mxu0 %v137
    %170 = vmatpush1.msra.mxu0 %v136
    %171 = vmatprep.subr.mxu0 %v139
    %172 = vmatpush1.msra.mxu0 %v138
    %173 = vmatprep.subr.mxu0 %v141
    %174 = vmatpush1.msra.mxu0 %v140
    %175 = vmatprep.subr.mxu0 %v143
    %176 = vmatpush1.msra.mxu0 %v142
    %177 = vmatprep.subr.mxu0 %v145
    %178 = vmatpush1.msra.mxu0 %v144
    %179 = vmatprep.subr.mxu0 %v147
    %180 = vmatpush1.msra.mxu0 %v146
    %181 = vmatprep.subr.mxu0 %v149
    %182 = vmatpush1.msra.mxu0 %v148
    %183 = vmatprep.subr.mxu0 %v151
    %184 = vmatpush1.msra.mxu0 %v150
    %185 = vmatprep.subr.mxu0 %v153
    %186 = vmatpush1.msra.mxu0 %v152
    %187 = vmatprep.subr.mxu0 %v155
    %188 = vmatpush1.msra.mxu0 %v154
    %189 = vmatprep.subr.mxu0 %v157
    %190 = vmatpush1.msra.mxu0 %v156
    %191 = vmatprep.subr.mxu0 %v159
    %192 = vmatpush1.msra.mxu0 %v158
    %193 = vmatprep.subr.mxu0 %v161
    %194 = vmatpush1.msra.mxu0 %v160
    %195 = vmatprep.subr.mxu0 %v163
    %196 = vmatpush1.msra.mxu0 %v162
    %197 = vmatprep.subr.mxu0 %v165
    %198 = vmatpush1.msra.mxu0 %v164
    %199 = vmatprep.subr.mxu0 %v167
    %200 = vmatpush1.msra.mxu0 %v166
    %201 = vmatprep.subr.mxu0 0.0
    %202 = vmatpush1.msra.mxu0 0.0
    %203 = vmatprep.subr.mxu0 0.0
    %204 = vmatpush1.msra.mxu0 0.0
    %205 = vmatprep.subr.mxu0 0.0
    %206 = vmatpush1.msra.mxu0 0.0
    %207 = vmatprep.subr.mxu0 0.0
    %208 = vmatpush1.msra.mxu0 0.0
    %209 = vmatprep.subr.mxu0 0.0
    %210 = vmatpush1.msra.mxu0 0.0
    %211 = vmatprep.subr.mxu0 0.0
    %212 = vmatpush1.msra.mxu0 0.0
    %213 = vmatprep.subr.mxu0 0.0
    %214 = vmatpush1.msra.mxu0 0.0
    %215 = vmatprep.subr.mxu0 0.0
    %216 = vmatpush1.msra.mxu0 0.0
    %217 = vmatprep.subr.mxu0 0.0
    %218 = vmatpush1.msra.mxu0 0.0
    %219 = vmatprep.subr.mxu0 0.0
    %220 = vmatpush1.msra.mxu0 0.0
    %221 = vmatprep.subr.mxu0 0.0
    %222 = vmatpush1.msra.mxu0 0.0
    %223 = vmatprep.subr.mxu0 0.0
    %224 = vmatpush1.msra.mxu0 0.0
    %225 = vmatprep.subr.mxu0 0.0
    %226 = vmatpush1.msra.mxu0 0.0
    %227 = vmatprep.subr.mxu0 0.0
    %228 = vmatpush1.msra.mxu0 0.0
    %229 = vmatprep.subr.mxu0 0.0
    %230 = vmatpush1.msra.mxu0 0.0
    %231 = vmatprep.subr.mxu0 0.0
    %232 = vmatpush1.msra.mxu0 0.0
    %233 = vmatprep.mubr.f32.mxu0 0.0
    %234 = vmatmul.mubr.f32.gmra.mrb[0].mxu0 %v168
    %v235 = vpop.f32.mrb[0].mxu0
    %v236 = vadd.f32 0.0, %v235
    %v237 = vpop.f32.mrb[0].mxu0
    %v238 = vadd.f32 0.0, %v237
    %239 = vdwg.mxu0
    %v240 = vlaneseq
    %v241 = vand.u32 %v240, 127
    %v242 = vstv %s25
    %v243 = vadd.s32 %v241, %v242
    %v244 = vld [vmem:[%s1] sm:$0xff]
    %v245 = vld [vmem:[%s1 + $0x8] sm:$0xff]
    %v246 = vld [vmem:[%s1 + $0x10] sm:$0xff]
    %v247 = vld [vmem:[%s1 + $0x18] sm:$0xff]
    %v248 = vld [vmem:[%s1 + $0x20] sm:$0xff]
    %v249 = vld [vmem:[%s1 + $0x28] sm:$0xff]
    %v250 = vld [vmem:[%s1 + $0x30] sm:$0xff]
    %v251 = vld [vmem:[%s1 + $0x38] sm:$0xff]
    %v252 = vld [vmem:[%s1 + $0x40] sm:$0xff]
    %v253 = vld [vmem:[%s1 + $0x48] sm:$0xff]
    %v254 = vld [vmem:[%s1 + $0x50] sm:$0xff]
    %v255 = vld [vmem:[%s1 + $0x58] sm:$0xff]
    %v256 = vld [vmem:[%s1 + $0x60] sm:$0xff]
    %v257 = vld [vmem:[%s1 + $0x68] sm:$0xff]
    %v258 = vld [vmem:[%s1 + $0x70] sm:$0xff]
    %v259 = vld [vmem:[%s1 + $0x78] sm:$0xff]
    %v260 = vld [vmem:[%s1 + $0x80] sm:$0xff]
    %v261 = vld [vmem:[%s1 + $0x88] sm:$0xff]
    %v262 = vld [vmem:[%s1 + $0x90] sm:$0xff]
    %v263 = vld [vmem:[%s1 + $0x98] sm:$0xff]
    %v264 = vld [vmem:[%s1 + $0xa0] sm:$0xff]
    %v265 = vld [vmem:[%s1 + $0xa8] sm:$0xff]
    %v266 = vld [vmem:[%s1 + $0xb0] sm:$0xff]
    %v267 = vld [vmem:[%s1 + $0xb8] sm:$0xff]
    %v268 = vld [vmem:[%s1 + $0xc0] sm:$0xff]
    %v269 = vld [vmem:[%s1 + $0xc8] sm:$0xff]
    %v270 = vld [vmem:[%s1 + $0xd0] sm:$0xff]
    %v271 = vld [vmem:[%s1 + $0xd8] sm:$0xff]
    %v272 = vld [vmem:[%s1 + $0xe0] sm:$0xff]
    %v273 = vld [vmem:[%s1 + $0xe8] sm:$0xff]
    %v274 = vld [vmem:[%s1 + $0xf0] sm:$0xff]
    %v275 = vld [vmem:[%s1 + $0xf8] sm:$0xff]
    %276 = vset.pattern.permute.xlu0 0
    %277 = vperm.xlu0 %276, %v244
    %v278 = vpop.permute.xlu0 %277
    %279 = vset.pattern.permute.xlu0 0
    %280 = vperm.xlu0 %279, %v245
    %v281 = vpop.permute.xlu0 %280
    %282 = vset.pattern.permute.xlu0 0
    %283 = vperm.xlu0 %282, %v246
    %v284 = vpop.permute.xlu0 %283
    %285 = vset.pattern.permute.xlu0 0
    %286 = vperm.xlu0 %285, %v247
    %v287 = vpop.permute.xlu0 %286
    %288 = vset.pattern.permute.xlu0 0
    %289 = vperm.xlu0 %288, %v248
    %v290 = vpop.permute.xlu0 %289
    %291 = vset.pattern.permute.xlu0 0
    %292 = vperm.xlu0 %291, %v249
    %v293 = vpop.permute.xlu0 %292
    %294 = vset.pattern.permute.xlu0 0
    %295 = vperm.xlu0 %294, %v250
    %v296 = vpop.permute.xlu0 %295
    %297 = vset.pattern.permute.xlu0 0
    %298 = vperm.xlu0 %297, %v251
    %v299 = vpop.permute.xlu0 %298
    %300 = vset.pattern.permute.xlu0 0
    %301 = vperm.xlu0 %300, %v252
    %v302 = vpop.permute.xlu0 %301
    %303 = vset.pattern.permute.xlu0 0
    %304 = vperm.xlu0 %303, %v253
    %v305 = vpop.permute.xlu0 %304
    %306 = vset.pattern.permute.xlu0 0
    %307 = vperm.xlu0 %306, %v254
    %v308 = vpop.permute.xlu0 %307
    %309 = vset.pattern.permute.xlu0 0
    %310 = vperm.xlu0 %309, %v255
    %v311 = vpop.permute.xlu0 %310
    %312 = vset.pattern.permute.xlu0 0
    %313 = vperm.xlu0 %312, %v256
    %v314 = vpop.permute.xlu0 %313
    %315 = vset.pattern.permute.xlu0 0
    %316 = vperm.xlu0 %315, %v257
    %v317 = vpop.permute.xlu0 %316
    %318 = vset.pattern.permute.xlu0 0
    %319 = vperm.xlu0 %318, %v258
    %v320 = vpop.permute.xlu0 %319
    %321 = vset.pattern.permute.xlu0 0
    %322 = vperm.xlu0 %321, %v259
    %v323 = vpop.permute.xlu0 %322
    %324 = vset.pattern.permute.xlu0 0
    %325 = vperm.xlu0 %324, %v260
    %v326 = vpop.permute.xlu0 %325
    %327 = vset.pattern.permute.xlu0 0
    %328 = vperm.xlu0 %327, %v261
    %v329 = vpop.permute.xlu0 %328
    %330 = vset.pattern.permute.xlu0 0
    %331 = vperm.xlu0 %330, %v262
    %v332 = vpop.permute.xlu0 %331
    %333 = vset.pattern.permute.xlu0 0
    %334 = vperm.xlu0 %333, %v263
    %v335 = vpop.permute.xlu0 %334
    %336 = vset.pattern.permute.xlu0 0
    %337 = vperm.xlu0 %336, %v264
    %v338 = vpop.permute.xlu0 %337
    %339 = vset.pattern.permute.xlu0 0
    %340 = vperm.xlu0 %339, %v265
    %v341 = vpop.permute.xlu0 %340
    %342 = vset.pattern.permute.xlu0 0
    %343 = vperm.xlu0 %342, %v266
    %v344 = vpop.permute.xlu0 %343
    %345 = vset.pattern.permute.xlu0 0
    %346 = vperm.xlu0 %345, %v267
    %v347 = vpop.permute.xlu0 %346
    %348 = vset.pattern.permute.xlu0 0
    %349 = vperm.xlu0 %348, %v268
    %v350 = vpop.permute.xlu0 %349
    %351 = vset.pattern.permute.xlu0 0
    %352 = vperm.xlu0 %351, %v269
    %v353 = vpop.permute.xlu0 %352
    %354 = vset.pattern.permute.xlu0 0
    %355 = vperm.xlu0 %354, %v270
    %v356 = vpop.permute.xlu0 %355
    %357 = vset.pattern.permute.xlu0 0
    %358 = vperm.xlu0 %357, %v271
    %v359 = vpop.permute.xlu0 %358
    %360 = vset.pattern.permute.xlu0 0
    %361 = vperm.xlu0 %360, %v272
    %v362 = vpop.permute.xlu0 %361
    %363 = vset.pattern.permute.xlu0 0
    %364 = vperm.xlu0 %363, %v273
    %v365 = vpop.permute.xlu0 %364
    %366 = vset.pattern.permute.xlu0 0
    %367 = vperm.xlu0 %366, %v274
    %v368 = vpop.permute.xlu0 %367
    %369 = vset.pattern.permute.xlu0 0
    %370 = vperm.xlu0 %369, %v275
    %v371 = vpop.permute.xlu0 %370
    %vm372 = vcmp.eq.s32.totalorder %v278, %v243
    %vm373 = vcmp.eq.s32.totalorder %v281, %v243
    %vm374 = vcmp.eq.s32.totalorder %v284, %v243
    %vm375 = vcmp.eq.s32.totalorder %v287, %v243
    %vm376 = vcmp.eq.s32.totalorder %v290, %v243
    %vm377 = vcmp.eq.s32.totalorder %v293, %v243
    %vm378 = vcmp.eq.s32.totalorder %v296, %v243
    %vm379 = vcmp.eq.s32.totalorder %v299, %v243
    %vm380 = vcmp.eq.s32.totalorder %v302, %v243
    %vm381 = vcmp.eq.s32.totalorder %v305, %v243
    %vm382 = vcmp.eq.s32.totalorder %v308, %v243
    %vm383 = vcmp.eq.s32.totalorder %v311, %v243
    %vm384 = vcmp.eq.s32.totalorder %v314, %v243
    %vm385 = vcmp.eq.s32.totalorder %v317, %v243
    %vm386 = vcmp.eq.s32.totalorder %v320, %v243
    %vm387 = vcmp.eq.s32.totalorder %v323, %v243
    %vm388 = vcmp.eq.s32.totalorder %v326, %v243
    %vm389 = vcmp.eq.s32.totalorder %v329, %v243
    %vm390 = vcmp.eq.s32.totalorder %v332, %v243
    %vm391 = vcmp.eq.s32.totalorder %v335, %v243
    %vm392 = vcmp.eq.s32.totalorder %v338, %v243
    %vm393 = vcmp.eq.s32.totalorder %v341, %v243
    %vm394 = vcmp.eq.s32.totalorder %v344, %v243
    %vm395 = vcmp.eq.s32.totalorder %v347, %v243
    %vm396 = vcmp.eq.s32.totalorder %v350, %v243
    %vm397 = vcmp.eq.s32.totalorder %v353, %v243
    %vm398 = vcmp.eq.s32.totalorder %v356, %v243
    %vm399 = vcmp.eq.s32.totalorder %v359, %v243
    %vm400 = vcmp.eq.s32.totalorder %v362, %v243
    %vm401 = vcmp.eq.s32.totalorder %v365, %v243
    %vm402 = vcmp.eq.s32.totalorder %v368, %v243
    %vm403 = vcmp.eq.s32.totalorder %v371, %v243
    %v404 = vsel %vm372, 1, 0
    %v405 = vsel %vm373, 1, 0
    %v406 = vsel %vm374, 1, 0
    %v407 = vsel %vm375, 1, 0
    %v408 = vsel %vm376, 1, 0
    %v409 = vsel %vm377, 1, 0
    %v410 = vsel %vm378, 1, 0
    %v411 = vsel %vm379, 1, 0
    %v412 = vsel %vm380, 1, 0
    %v413 = vsel %vm381, 1, 0
    %v414 = vsel %vm382, 1, 0
    %v415 = vsel %vm383, 1, 0
    %v416 = vsel %vm384, 1, 0
    %v417 = vsel %vm385, 1, 0
    %v418 = vsel %vm386, 1, 0
    %v419 = vsel %vm387, 1, 0
    %v420 = vsel %vm388, 1, 0
    %v421 = vsel %vm389, 1, 0
    %v422 = vsel %vm390, 1, 0
    %v423 = vsel %vm391, 1, 0
    %v424 = vsel %vm392, 1, 0
    %v425 = vsel %vm393, 1, 0
    %v426 = vsel %vm394, 1, 0
    %v427 = vsel %vm395, 1, 0
    %v428 = vsel %vm396, 1, 0
    %v429 = vsel %vm397, 1, 0
    %v430 = vsel %vm398, 1, 0
    %v431 = vsel %vm399, 1, 0
    %v432 = vsel %vm400, 1, 0
    %v433 = vsel %vm401, 1, 0
    %v434 = vsel %vm402, 1, 0
    %v435 = vsel %vm403, 1, 0
    %v436 = vcvt.s32.f32 %v404
    %v437 = vcvt.s32.f32 %v405
    %v438 = vcvt.s32.f32 %v406
    %v439 = vcvt.s32.f32 %v407
    %v440 = vcvt.s32.f32 %v408
    %v441 = vcvt.s32.f32 %v409
    %v442 = vcvt.s32.f32 %v410
    %v443 = vcvt.s32.f32 %v411
    %v444 = vcvt.s32.f32 %v412
    %v445 = vcvt.s32.f32 %v413
    %v446 = vcvt.s32.f32 %v414
    %v447 = vcvt.s32.f32 %v415
    %v448 = vcvt.s32.f32 %v416
    %v449 = vcvt.s32.f32 %v417
    %v450 = vcvt.s32.f32 %v418
    %v451 = vcvt.s32.f32 %v419
    %v452 = vcvt.s32.f32 %v420
    %v453 = vcvt.s32.f32 %v421
    %v454 = vcvt.s32.f32 %v422
    %v455 = vcvt.s32.f32 %v423
    %v456 = vcvt.s32.f32 %v424
    %v457 = vcvt.s32.f32 %v425
    %v458 = vcvt.s32.f32 %v426
    %v459 = vcvt.s32.f32 %v427
    %v460 = vcvt.s32.f32 %v428
    %v461 = vcvt.s32.f32 %v429
    %v462 = vcvt.s32.f32 %v430
    %v463 = vcvt.s32.f32 %v431
    %v464 = vcvt.s32.f32 %v432
    %v465 = vcvt.s32.f32 %v433
    %v466 = vcvt.s32.f32 %v434
    %v467 = vcvt.s32.f32 %v435
    %v468 = vld [vmem:[#allocation2] sm:$0x1]
    %469 = vmatprep.subr.mxu0 0.0
    %470 = vmatpush1.msra.mxu0 %v436
    %471 = vmatprep.subr.mxu0 0.0
    %472 = vmatpush1.msra.mxu0 %v437
    %473 = vmatprep.subr.mxu0 0.0
    %474 = vmatpush1.msra.mxu0 %v438
    %475 = vmatprep.subr.mxu0 0.0
    %476 = vmatpush1.msra.mxu0 %v439
    %477 = vmatprep.subr.mxu0 0.0
    %478 = vmatpush1.msra.mxu0 %v440
    %479 = vmatprep.subr.mxu0 0.0
    %480 = vmatpush1.msra.mxu0 %v441
    %481 = vmatprep.subr.mxu0 0.0
    %482 = vmatpush1.msra.mxu0 %v442
    %483 = vmatprep.subr.mxu0 0.0
    %484 = vmatpush1.msra.mxu0 %v443
    %485 = vmatprep.subr.mxu0 0.0
    %486 = vmatpush1.msra.mxu0 %v444
    %487 = vmatprep.subr.mxu0 0.0
    %488 = vmatpush1.msra.mxu0 %v445
    %489 = vmatprep.subr.mxu0 0.0
    %490 = vmatpush1.msra.mxu0 %v446
    %491 = vmatprep.subr.mxu0 0.0
    %492 = vmatpush1.msra.mxu0 %v447
    %493 = vmatprep.subr.mxu0 0.0
    %494 = vmatpush1.msra.mxu0 %v448
    %495 = vmatprep.subr.mxu0 0.0
    %496 = vmatpush1.msra.mxu0 %v449
    %497 = vmatprep.subr.mxu0 0.0
    %498 = vmatpush1.msra.mxu0 %v450
    %499 = vmatprep.subr.mxu0 0.0
    %500 = vmatpush1.msra.mxu0 %v451
    %501 = vmatprep.subr.mxu0 0.0
    %502 = vmatpush1.msra.mxu0 %v452
    %503 = vmatprep.subr.mxu0 0.0
    %504 = vmatpush1.msra.mxu0 %v453
    %505 = vmatprep.subr.mxu0 0.0
    %506 = vmatpush1.msra.mxu0 %v454
    %507 = vmatprep.subr.mxu0 0.0
    %508 = vmatpush1.msra.mxu0 %v455
    %509 = vmatprep.subr.mxu0 0.0
    %510 = vmatpush1.msra.mxu0 %v456
    %511 = vmatprep.subr.mxu0 0.0
    %512 = vmatpush1.msra.mxu0 %v457
    %513 = vmatprep.subr.mxu0 0.0
    %514 = vmatpush1.msra.mxu0 %v458
    %515 = vmatprep.subr.mxu0 0.0
    %516 = vmatpush1.msra.mxu0 %v459
    %517 = vmatprep.subr.mxu0 0.0
    %518 = vmatpush1.msra.mxu0 %v460
    %519 = vmatprep.subr.mxu0 0.0
    %520 = vmatpush1.msra.mxu0 %v461
    %521 = vmatprep.subr.mxu0 0.0
    %522 = vmatpush1.msra.mxu0 %v462
    %523 = vmatprep.subr.mxu0 0.0
    %524 = vmatpush1.msra.mxu0 %v463
    %525 = vmatprep.subr.mxu0 0.0
    %526 = vmatpush1.msra.mxu0 %v464
    %527 = vmatprep.subr.mxu0 0.0
    %528 = vmatpush1.msra.mxu0 %v465
    %529 = vmatprep.subr.mxu0 0.0
    %530 = vmatpush1.msra.mxu0 %v466
    %531 = vmatprep.subr.mxu0 0.0
    %532 = vmatpush1.msra.mxu0 %v467
    %533 = vmatprep.mubr.f32.mxu0 %v238
    %534 = vmatmul.mubr.f32.gmra.mrb[0].mxu0 %v236
    %v535 = vpop.f32.mrb[0].mxu0
    %v536 = vadd.f32 0.0, %v535
    %v537 = vpop.f32.mrb[0].mxu0
    %538 = vdwg.mxu0
    %v539 = vadd.f32 %v468, %v536
    %540 = vst [vmem:[#allocation2] sm:$0x1] %v539
    // Predicated region
    $region30: #{tpu_custom_call.1} parent=1 // pred_check
      %p541 = pneg %p26
    $region31: #{tpu_custom_call.1} parent=1 // pred_check_branch
      %543 = sbr.rel (%p541) target = $region33
    $region32: #{tpu_custom_call.1} parent=1 // pred_region
      %v544 = vld [vmem:[%s3] sm:$0xff]
      %v545 = vld [vmem:[%s4] sm:$0xff]
      %547 = vset.pattern.permute.xlu0 1
      %548 = vperm.xlu0 %547, %v545
      %v549 = vpop.permute.xlu0 %548
      %v551 = vmul.f32 %v544, %v549
      %v552 = vrot.slane %v551, 4
      %v553 = vadd.f32 %v551, %v552
      %v554 = vrot.slane %v553, 2
      %v555 = vadd.f32 %v553, %v554
      %v556 = vrot.slane %v555, 1
      %v557 = vadd.f32 %v555, %v556
      %v558 = vld [vmem:[#allocation2] sm:$0x1]
      %v559 = vadd.f32 %v558, %v557
      %s560 = sld [smem:[#allocation4]]
      %v561 = vstv %s560
      %v562 = vadd.f32 %v559, %v561
      %v563 = vtanh.pop %v562
      %564 = vst [vmem:[#allocation5] sm:$0x1] %v563
    $region33: #{tpu_custom_call.1} parent=1 // pred_fallthru
      _
    // Predicated region
    $region34: #{tpu_custom_call.1} parent=1 // pred_check
      _
    $region35: #{tpu_custom_call.1} parent=1 // pred_check_branch
      %566 = sbr.rel (0) target = $region37
    $region36: #{tpu_custom_call.1} parent=1 // pred_region
      %s568 = ssub.s32 16, 16
      %569 = vsyncadd [#allocation6], %s568
      %s571 = sshll.u32 [#allocation5], 4
      %s572 = int_to_ptr.vmem [resolvable:$true] %s571
      %574 = dma.vmem_to_hbm [thread:$0]  %s572, 16, %s6, [#allocation6]
    $region37: #{tpu_custom_call.1} parent=1 // pred_fallthru
      _
    // Predicated region
    $region38: #{tpu_custom_call.1} parent=1 // pred_check
      _
    $region39: #{tpu_custom_call.1} parent=1 // pred_check_branch
      %576 = sbr.rel (0) target = $region41
    $region40: #{tpu_custom_call.1} parent=1 // pred_region
      %577 = dma.done [#allocation6], 16
    $region41: #{tpu_custom_call.1} parent=1 // pred_fallthru
      _
    %578 = vsyncpa [#allocation6], 1

</llo_original>
